<compile_context>
chip_gen: v7x
topology: tpu7x:2x2x1
jax: 0.10.0
libtpu: 0.0.40
codegen_flags: <defaults>
</compile_context>

<pallas_src>
import jax
import jax.numpy as jnp
import numpy as np
from jax.experimental import pallas as pl
from jax.experimental.pallas import tpu as pltpu


def _whiten_kernel(perm_ref, a_ref, b_ref, x_ref, o_ref):
    # perm_ref / a_ref / b_ref are SMEM scalar-prefetch refs of shape (C,).
    c = pl.program_id(1)
    a = a_ref[c]                         # scale / std[c]
    b = b_ref[c]                         # mean[c] / std[c]
    x = x_ref[...].astype(jnp.float32)   # (TN, 1, R, L) tile, already channel-permuted
    x = jnp.clip(x, 0.0, 1.0)            # torch.clamp(x, 0, 1)
    # (clip(x)*scale - mean) / std  ==  clip(x) * a - b
    o_ref[...] = (x * a - b).astype(o_ref.dtype)


def whiten_pallas(x, mean, std, perm, scale):
    """x: (N, C, H, W); mean/std: (C,) float32; perm: (C,) int32; scale: python float."""
    N, C, H, W = x.shape
    itemsize = jnp.dtype(x.dtype).itemsize

    # Lane-dense spatial layout when possible (free contiguous reshape).
    lane_dense = (H * W) % 128 == 0
    if lane_dense:
        R, L = (H * W) // 128, 128
        xr = x.reshape(N, C, R, L)
    else:
        R, L = H, W
        xr = x

    # Batch TN images per grid step.  Target ~2-4 MiB blocks (mem-bound sweet
    # spot) while keeping the double-buffered in+out working set (~4x block)
    # well inside every generation's scoped VMEM (v5e 16 MiB default, v7x
    # 64 MiB physical).
    plane_bytes = R * L * itemsize
    TN = int(max(1, min(N, 32, (4 << 20) // max(plane_bytes, 1))))

    # Fold scale / mean / std into multiply-subtract constants (no divide in kernel).
    a = (jnp.asarray(scale, jnp.float32) / std.astype(jnp.float32)).astype(jnp.float32)
    b = (mean.astype(jnp.float32) / std.astype(jnp.float32)).astype(jnp.float32)

    block = (TN, 1, R, L)
    grid = (pl.cdiv(N, TN), C)

    out = pl.pallas_call(
        _whiten_kernel,
        out_shape=jax.ShapeDtypeStruct((N, C, R, L), x.dtype),
        grid_spec=pltpu.PrefetchScalarGridSpec(
            num_scalar_prefetch=3,
            grid=grid,
            in_specs=[
                # BGR swap done here: output channel c reads input channel perm[c].
                pl.BlockSpec(block, lambda n, c, perm, a, b: (n, perm[c], 0, 0)),
            ],
            out_specs=pl.BlockSpec(block, lambda n, c, perm, a, b: (n, c, 0, 0)),
        ),
        compiler_params=pltpu.CompilerParams(
            dimension_semantics=("parallel", "parallel"),
            vmem_limit_bytes=32 * 1024 * 1024,
        ),
    )(perm, a, b, xr)

    if lane_dense:
        out = out.reshape(N, C, H, W)
    return out


class StandardModelPallas:
    """JAX/Pallas port of StandardModel (whiten path)."""

    def __init__(self, input_size, mean, std, input_space, input_range):
        assert len(input_size) == 3, "image (3-D) variant implemented here"
        self.input_size = tuple(input_size)
        self.input_space = input_space
        self.input_range = list(input_range)
        # deterministic, in-script "parameters" (mean/std buffers of the net)
        self.mean = jnp.asarray(mean, jnp.float32)   # (C,)
        self.std = jnp.asarray(std, jnp.float32)     # (C,)
        C = self.input_size[0]
        if self.input_space == 'BGR':
            assert C == 3
            self.perm = jnp.asarray([2, 1, 0], jnp.int32)
        else:
            self.perm = jnp.arange(C, dtype=jnp.int32)
        self.scale = 255.0 if max(self.input_range) == 255 else 1.0

    def whiten(self, x):
        return whiten_pallas(x, self.mean, self.std, self.perm, self.scale)

    def forward(self, x):
        # Same as the reference module: the wrapped net is external.
        raise NotImplementedError


def _whiten_ref(x, mean, std, perm, scale):
    x = x[:, np.asarray(perm), :, :]
    x = jnp.clip(x, 0.0, 1.0)
    if scale != 1.0:
        x = x * scale
    return (x - mean.reshape(1, -1, 1, 1)) / std.reshape(1, -1, 1, 1)


if __name__ == "__main__":
    key = jax.random.PRNGKey(0)

    # --- test 1: BGR, [0,1] range, lane-dense path (H*W % 128 == 0) ---
    N, C, H, W = 2, 3, 16, 16
    k1, k2 = jax.random.split(key)
    x = jax.random.uniform(k1, (N, C, H, W), jnp.float32, minval=-0.2, maxval=1.2)

    model = StandardModelPallas(
        input_size=(C, H, W),
        mean=[0.485, 0.456, 0.406],
        std=[0.229, 0.224, 0.225],
        input_space='BGR',            # exercises the channel-permute path
        input_range=[0, 1],
    )
    out = jax.block_until_ready(model.whiten(x))
    ref = _whiten_ref(x, model.mean, model.std, np.array(model.perm), model.scale)
    np.testing.assert_allclose(np.asarray(out), np.asarray(ref), rtol=1e-5, atol=1e-5)

    # --- test 2: RGB, [0,255] range, fallback path (H*W % 128 != 0) ---
    N2, C2, H2, W2 = 2, 4, 7, 7
    x2 = jax.random.uniform(k2, (N2, C2, H2, W2), jnp.float32, minval=-0.2, maxval=1.2)
    model2 = StandardModelPallas(
        input_size=(C2, H2, W2),
        mean=[0.5, 0.5, 0.5, 0.5],
        std=[0.25, 0.25, 0.25, 0.25],
        input_space='RGB',
        input_range=[0, 255],         # exercises the *255 path
    )
    out2 = jax.block_until_ready(model2.whiten(x2))
    ref2 = _whiten_ref(x2, model2.mean, model2.std, np.array(model2.perm), model2.scale)
    np.testing.assert_allclose(np.asarray(out2), np.asarray(ref2), rtol=1e-5, atol=1e-4)

    print("KERNEL_OK")
</pallas_src>

<mosaic_0001>
module attributes {stable_mosaic.version = 11 : i64} {
  func.func @_whiten_kernel(%arg0: i32, %arg1: i32, %arg2: memref<3xi32, #tpu.memory_space<smem>>, %arg3: memref<3xf32, #tpu.memory_space<smem>>, %arg4: memref<3xf32, #tpu.memory_space<smem>>, %arg5: memref<2x1x2x128xf32, #tpu.memory_space<vmem>>, %arg6: memref<2x1x2x128xf32, #tpu.memory_space<vmem>>) attributes {dimension_semantics = [#tpu.dimension_semantics<parallel>, #tpu.dimension_semantics<parallel>], iteration_bounds = array<i64: 1, 3>, scalar_prefetch = 3 : i64, scratch_operands = 0 : i64, tpu.core_type = #tpu.core_type<tc>, window_params = [{transform_indices = @transform_0, window_bounds = array<i64: 2, 1, 2, 128>}, {transform_indices = @transform_1, window_bounds = array<i64: 2, 1, 2, 128>}]} {
    %0 = arith.index_cast %arg1 : i32 to index
    %1 = memref.load %arg3[%0] : memref<3xf32, #tpu.memory_space<smem>>
    %2 = arith.index_cast %arg1 : i32 to index
    %3 = memref.load %arg4[%2] : memref<3xf32, #tpu.memory_space<smem>>
    %c0 = arith.constant 0 : index
    %c0_0 = arith.constant 0 : index
    %c0_1 = arith.constant 0 : index
    %c0_2 = arith.constant 0 : index
    %4 = vector.load %arg5[%c0, %c0_0, %c0_1, %c0_2] : memref<2x1x2x128xf32, #tpu.memory_space<vmem>>, vector<2x1x2x128xf32>
    %cst = arith.constant 0.000000e+00 : f32
    %cst_3 = arith.constant 1.000000e+00 : f32
    %5 = vector.broadcast %cst : f32 to vector<2x1x2x128xf32>
    %6 = arith.maximumf %5, %4 : vector<2x1x2x128xf32>
    %7 = vector.broadcast %cst_3 : f32 to vector<2x1x2x128xf32>
    %8 = arith.minimumf %7, %6 : vector<2x1x2x128xf32>
    %9 = vector.broadcast %1 : f32 to vector<2x1x2x128xf32>
    %10 = arith.mulf %8, %9 : vector<2x1x2x128xf32>
    %11 = vector.broadcast %3 : f32 to vector<2x1x2x128xf32>
    %12 = arith.subf %10, %11 : vector<2x1x2x128xf32>
    %c0_4 = arith.constant 0 : index
    %c0_5 = arith.constant 0 : index
    %c0_6 = arith.constant 0 : index
    %c0_7 = arith.constant 0 : index
    %13 = vector.load %arg6[%c0_4, %c0_5, %c0_6, %c0_7] : memref<2x1x2x128xf32, #tpu.memory_space<vmem>>, vector<2x1x2x128xf32>
    tpu.vector_store %arg6[%c0_4, %c0_5, %c0_6, %c0_7], %12 {strides = array<i32>} : memref<2x1x2x128xf32, #tpu.memory_space<vmem>>, vector<2x1x2x128xf32>,
    return
  }
  func.func @transform_0(%arg0: i32, %arg1: i32, %arg2: memref<3xi32, #tpu.memory_space<smem>>, %arg3: memref<3xf32, #tpu.memory_space<smem>>, %arg4: memref<3xf32, #tpu.memory_space<smem>>) -> (i32, i32, i32, i32) {
    %0 = arith.index_cast %arg1 : i32 to index
    %1 = memref.load %arg2[%0] : memref<3xi32, #tpu.memory_space<smem>>
    %c0_i32 = arith.constant 0 : i32
    %c0_i32_0 = arith.constant 0 : i32
    %c0_i32_1 = arith.constant 0 : i32
    return %arg0, %1, %c0_i32, %c0_i32_0 : i32, i32, i32, i32
  }
  func.func @transform_1(%arg0: i32, %arg1: i32, %arg2: memref<3xi32, #tpu.memory_space<smem>>, %arg3: memref<3xf32, #tpu.memory_space<smem>>, %arg4: memref<3xf32, #tpu.memory_space<smem>>) -> (i32, i32, i32, i32) {
    %c0_i32 = arith.constant 0 : i32
    %c0_i32_0 = arith.constant 0 : i32
    %c0_i32_1 = arith.constant 0 : i32
    return %arg0, %arg1, %c0_i32, %c0_i32_0 : i32, i32, i32, i32
  }
}

</mosaic_0001>

<llo_original>
// kernel: tpu_custom_call.1
$region0: #{tpu_custom_call.1}
  #allocation0 [shape = 'u32[]', space=smem, size = 0x4, offset = 0x4, fixed_abs, tag = 'smem constant byte address 0x4 - core index']
  #allocation1 [shape = 'u32[144,128]{1,0:T(1,128)}', space=vmem, size = 0x12000, scoped, tag = 'internal scratch']
  #allocation2 [shape = 's32[1]{0}', space=sflag, size = 0x4, scoped, tag = 'scoped memory for tpu_custom_call.1']
  #allocation3 [shape = 'u8[512]{0}', space=smem, size = 0x200, scoped, tag = 'prefetched SMEM operand 0']
  #allocation4 [shape = 'u8[512]{0}', space=smem, size = 0x200, scoped, tag = 'prefetched SMEM operand 1']
  #allocation5 [shape = 'u8[512]{0}', space=smem, size = 0x200, scoped, tag = 'prefetched SMEM operand 2']
  %s0 = inlined_call_operand.hbm [shape: s32[3], index: 0, kind: input, shape index: {}]
  %s1 = inlined_call_operand.vmem [shape: f32[3], index: 1, kind: input, shape index: {}]
  %s2 = inlined_call_operand.vmem [shape: f32[3], index: 2, kind: input, shape index: {}]
  %s3 = inlined_call_operand.hbm [shape: f32[2,3,2,128], index: 3, kind: input, shape index: {}]
  %s4 = inlined_call_operand.hbm [shape: f32[2,3,2,128], index: 4, kind: output, shape index: {}]
  %s5 = sld [smem:[#allocation0]]
  $region41: #{tpu_custom_call.1} parent=0
    _
  %s7 = ssub.s32 1, %s5
  %s8 = scalar_select 0, %s7, %s5
  %10 = dma.hbm_to_smem %s0, 16, [#allocation3], [#allocation2]
  %s11 = sshll.u32 %s1, 4
  %s12 = int_to_ptr.vmem [resolvable:$true] %s11
  %14 = dma.vmem_to_smem %s12, 16, [#allocation4], [#allocation2]
  %s15 = sshll.u32 %s2, 4
  %s16 = int_to_ptr.vmem [resolvable:$true] %s15
  %18 = dma.vmem_to_smem %s16, 16, [#allocation5], [#allocation2]
  %19 = dma.done [#allocation2], 48
  %20 = sfence
  $region1: #{tpu_custom_call.1} parent=0
    #allocation6 [shape = 'u8[4096]{0}', space=vmem, size = 0x1000, scoped, tag = 'input window, operand 3']
    #allocation7 [shape = 's32[2]{0}', space=sflag, size = 0x8, scoped, tag = 'scoped memory for tpu_custom_call.1']
    #allocation8 [shape = 's32[2]{0}', space=sflag, size = 0x8, scoped, tag = 'scoped memory for tpu_custom_call.1']
    #allocation9 [shape = 'u8[4096]{0}', space=vmem, size = 0x1000, scoped, tag = 'output window, operand 0']
    %21 = vsyncpa [#allocation7], 0
    %s22 = scalar_lea.sflag [#allocation7], 1
    %23 = vsyncpa %s22, 0
    %24 = vsyncpa [#allocation8], 0
    %s25 = scalar_lea.sflag [#allocation8], 1
    %26 = vsyncpa %s25, 0
    loop: start=0, step=1, limit=5
    $region2: #{tpu_custom_call.1} parent=1 // loop_pre_header
      _
    $region3: #{tpu_custom_call.1} parent=1 // loop_header
      %s28 = sphi 0, %s32
      %p29 = scmp.ge.s32.totalorder %s28, 5
      %s35 = sphi 0, %s47
      %s36 = sphi 0, %s43
      %s37 = sphi 0, %s35
      %s38 = sphi 0, %s36
      %s39 = sphi 0, %s37
      %s40 = sphi 0, %s38
      %s54 = sphi 0, %s56
      %s57 = sphi 0, %s54
      %s58 = sphi 0, %s57
      %s74 = sphi 0, %s58
      %s82 = sphi 0, %s84
      %s85 = sphi 0, %s82
      %s86 = sphi 0, %s85
      %s102 = sphi 0, %s86
    $region4: #{tpu_custom_call.1} parent=1 // loop_header_branch
      %31 = sbr.rel (%p29) target = $region8
    $region5: #{tpu_custom_call.1} parent=1 // loop_body
      %s33 = ssub.s32 %s28, 1
      %s34 = ssub.s32 %s28, 2
      %s41 = sadd.s32 1, %s36
      %p42 = scmp.ge.s32.totalorder %s41, 3
      %s43 = scalar_select %p42, 0, %s41
      %s44 = sadd.s32 1, %s35
      %s45 = scalar_select %p42, %s44, %s35
      %p46 = scmp.ge.s32.totalorder %s45, 1
      %s47 = scalar_select %p46, 0, %s45
      %s48 = sld [smem:[#allocation3 + %s36]]
      %s49 = sld [smem:[#allocation3 + %s43]]
      %s50 = ssub.s32 %s35, %s47
      %s51 = ssub.s32 %s48, %s49
      %s52 = sor.u32 %s50, %s51
      %p53 = scmp.eq.s32.totalorder %s52, 0
      %s55 = sadd.s32 %s54, 1
      %s56 = scalar_select %p53, %s54, %s55
      %p59 = pneg %p53
      %p60 = scmp.eq.s32.totalorder %s28, 2
      %p61 = por %p59, %p60
      %p62 = scmp.ne.s32.totalorder %s54, %s57
      %p63 = scmp.eq.s32.totalorder %s28, 0
      %p64 = por %p62, %p63
      %p65 = scmp.ne.s32.totalorder %s54, %s57
      %p66 = scmp.eq.s32.totalorder %s33, 2
      %p67 = por %p65, %p66
      %p68 = scmp.ne.s32.totalorder %s57, %s58
      %p69 = scmp.eq.s32.totalorder %s33, 0
      %p70 = por %p68, %p69
      %p71 = scmp.ne.s32.totalorder %s57, %s58
      %p72 = scmp.eq.s32.totalorder %s34, 2
      %p73 = por %p71, %p72
      %p75 = scmp.ne.s32.totalorder %s58, %s74
      %p76 = scmp.eq.s32.totalorder %s34, 0
      %p77 = por %p75, %p76
      %s78 = ssub.s32 %s35, %s47
      %s79 = ssub.s32 %s36, %s43
      %s80 = sor.u32 %s78, %s79
      %p81 = scmp.eq.s32.totalorder %s80, 0
      %s83 = sadd.s32 %s82, 1
      %s84 = scalar_select %p81, %s82, %s83
      %p87 = pneg %p81
      %p88 = scmp.eq.s32.totalorder %s28, 2
      %p89 = por %p87, %p88
      %p90 = scmp.ne.s32.totalorder %s82, %s85
      %p91 = scmp.eq.s32.totalorder %s28, 0
      %p92 = por %p90, %p91
      %p93 = scmp.ne.s32.totalorder %s82, %s85
      %p94 = scmp.eq.s32.totalorder %s33, 2
      %p95 = por %p93, %p94
      %p96 = scmp.ne.s32.totalorder %s85, %s86
      %p97 = scmp.eq.s32.totalorder %s33, 0
      %p98 = por %p96, %p97
      %p99 = scmp.ne.s32.totalorder %s85, %s86
      %p100 = scmp.eq.s32.totalorder %s34, 2
      %p101 = por %p99, %p100
      %p103 = scmp.ne.s32.totalorder %s86, %s102
      %p104 = scmp.eq.s32.totalorder %s34, 0
      %p105 = por %p103, %p104
      %p106 = scmp.le.s32.totalorder 1, %s28
      %p107 = scmp.lt.s32.totalorder %s28, 4
      %p108 = pnand %p106, %p107
      %p109 = pneg %p108
      // Predicated region
      $region9: #{tpu_custom_call.1} parent=5 // pred_check
        _
      $region10: #{tpu_custom_call.1} parent=5 // pred_check_branch
        %111 = sbr.rel (%p108) target = $region12
      $region11: #{tpu_custom_call.1} parent=5 // pred_region
        %s112 = ssub.s32 %s28, 1
      $region12: #{tpu_custom_call.1} parent=5 // pred_fallthru
        _
      %p113 = scmp.lt.s32.totalorder %s28, 3
      // Predicated region
      $region13: #{tpu_custom_call.1} parent=5 // pred_check
        %p114 = pneg %p113
      $region14: #{tpu_custom_call.1} parent=5 // pred_check_branch
        %116 = sbr.rel (%p114) target = $region16
      $region15: #{tpu_custom_call.1} parent=5 // pred_region
        // Predicated region
        $region17: #{tpu_custom_call.1} parent=15 // pred_check
          %p117 = pneg %p64
        $region18: #{tpu_custom_call.1} parent=15 // pred_check_branch
          %119 = sbr.rel (%p117) target = $region20
        $region19: #{tpu_custom_call.1} parent=15 // pred_region
          %s120 = sand.u32 %s54, 1
          %s121 = scalar_lea.sflag [#allocation7], %s120
          %s122 = sand.u32 %s54, 1
          %s123 = smul.addr %s122, 4
          %s124 = scalar_lea.vmem [#allocation6], %s123
          %s125 = sld [smem:[#allocation3 + %s36]]
          %s126 = smul.u32 2, %s35
          %s128 = ssub.s32 64, 64
          %129 = vsyncadd %s121, %s128
          %s130 = smul.addr %s126, 3
          %s131 = sadd.s32 %s125, %s130
          %s132 = smul.addr %s131, 32
          %s133 = scalar_lea.hbm %s3, %s132
          %s134 = sshll.u32 %s124, 4
          %s135 = int_to_ptr.vmem [resolvable:$true] %s134
          %140 = dma.hbm_to_vmem [thread:$0]  %s133, 64, %s135, %s121, 96, 32, 2
        $region20: #{tpu_custom_call.1} parent=15 // pred_fallthru
          _
      $region16: #{tpu_custom_call.1} parent=5 // pred_fallthru
        _
      %p141 = scmp.le.s32.totalorder 1, %s28
      %p142 = scmp.lt.s32.totalorder %s28, 4
      %p143 = pnand %p141, %p142
      %p144 = pneg %p143
      // Predicated region
      $region21: #{tpu_custom_call.1} parent=5 // pred_check
        _
      $region22: #{tpu_custom_call.1} parent=5 // pred_check_branch
        %146 = sbr.rel (%p143) target = $region24
      $region23: #{tpu_custom_call.1} parent=5 // pred_region
        %s147 = ssub.s32 %s28, 1
        %s148 = sand.u32 %s57, 1
        %s149 = scalar_lea.sflag [#allocation7], %s148
        %s150 = sand.u32 %s57, 1
        %s151 = smul.addr %s150, 4
        %s152 = scalar_lea.vmem [#allocation6], %s151
        // Predicated region
        $region25: #{tpu_custom_call.1} parent=23 // pred_check
          %p153 = pneg %p70
        $region26: #{tpu_custom_call.1} parent=23 // pred_check_branch
          %155 = sbr.rel (%p153) target = $region28
        $region27: #{tpu_custom_call.1} parent=23 // pred_region
          %156 = dma.done %s149, 64
        $region28: #{tpu_custom_call.1} parent=23 // pred_fallthru
          _
        %s157 = sand.u32 %s57, 1
        %s158 = scalar_lea.sflag [#allocation7], %s157
        %s159 = sand.u32 %s57, 1
        %s160 = smul.addr %s159, 4
        %s161 = scalar_lea.vmem [#allocation6], %s160
        %p162 = pneg %p70
        %p163 = pneg %p67
        %p164 = pneg %p98
        %p165 = pneg %p95
        %s166 = sand.u32 %s85, 1
        %s167 = scalar_lea.sflag [#allocation8], %s166
        %s168 = sand.u32 %s85, 1
        %s169 = smul.addr %s168, 4
        %s170 = scalar_lea.vmem [#allocation9], %s169
        %s171 = sld [smem:[#allocation3 + %s38]]
        %s172 = smul.u32 2, %s37
        %s173 = smul.u32 2, %s37
        %s174 = sld [smem:[#allocation4 + %s38]]
        %s175 = sld [smem:[#allocation5 + %s38]]
        %v176 = vld [vmem:[%s152] sm:$0x3]
        %v177 = vld [vmem:[%s152 + $0x2] sm:$0x3]
        %v178 = vmax.f32 %v176, 0.0
        %v179 = vmax.f32 %v177, 0.0
        %v180 = vmin.f32 %v178, 1.0
        %v181 = vmin.f32 %v179, 1.0
        %v182 = vstv %s174
        %v183 = vmul.f32 %v180, %v182
        %v184 = vmul.f32 %v181, %v182
        %v185 = vstv %s175
        %v186 = vsub.f32 %v183, %v185
        %v187 = vsub.f32 %v184, %v185
        %188 = vst [vmem:[%s170] sm:$0x3] %v186
        %189 = vst [vmem:[%s170 + $0x2] sm:$0x3] %v187
        %s190 = sand.u32 %s85, 1
        %s191 = scalar_lea.sflag [#allocation8], %s190
        %s192 = sand.u32 %s85, 1
        %s193 = smul.addr %s192, 4
        %s194 = scalar_lea.vmem [#allocation9], %s193
        // Predicated region
        $region29: #{tpu_custom_call.1} parent=23 // pred_check
          %p195 = pneg %p95
        $region30: #{tpu_custom_call.1} parent=23 // pred_check_branch
          %197 = sbr.rel (%p195) target = $region32
        $region31: #{tpu_custom_call.1} parent=23 // pred_region
          %s198 = smul.u32 2, %s37
          %s200 = ssub.s32 64, 64
          %201 = vsyncadd %s191, %s200
          %s202 = smul.addr %s198, 3
          %s203 = sadd.s32 %s38, %s202
          %s204 = smul.addr %s203, 32
          %s205 = scalar_lea.hbm %s4, %s204
          %s206 = sshll.u32 %s194, 4
          %s207 = int_to_ptr.vmem [resolvable:$true] %s206
          %212 = dma.vmem_to_hbm [thread:$0]  %s207, 64, %s205, %s191, 32, 96, 2
        $region32: #{tpu_custom_call.1} parent=23 // pred_fallthru
          _
      $region24: #{tpu_custom_call.1} parent=5 // pred_fallthru
        _
      %p213 = scmp.le.s32.totalorder 2, %s28
      // Predicated region
      $region33: #{tpu_custom_call.1} parent=5 // pred_check
        %p214 = pneg %p213
      $region34: #{tpu_custom_call.1} parent=5 // pred_check_branch
        %216 = sbr.rel (%p214) target = $region36
      $region35: #{tpu_custom_call.1} parent=5 // pred_region
        %s217 = ssub.s32 %s28, 2
        // Predicated region
        $region37: #{tpu_custom_call.1} parent=35 // pred_check
          %p218 = pneg %p101
        $region38: #{tpu_custom_call.1} parent=35 // pred_check_branch
          %220 = sbr.rel (%p218) target = $region40
        $region39: #{tpu_custom_call.1} parent=35 // pred_region
          %s221 = sand.u32 %s86, 1
          %s222 = scalar_lea.sflag [#allocation8], %s221
          %s223 = sand.u32 %s86, 1
          %s224 = smul.addr %s223, 4
          %s225 = scalar_lea.vmem [#allocation9], %s224
          %226 = dma.done %s222, 64
        $region40: #{tpu_custom_call.1} parent=35 // pred_fallthru
          _
      $region36: #{tpu_custom_call.1} parent=5 // pred_fallthru
        _
    $region6: #{tpu_custom_call.1} parent=1 // loop_footer
      %s32 = sadd.s32 1, %s28
    $region7: #{tpu_custom_call.1} parent=1 // loop_footer_branch
      %27 = sbr.rel target = $region3
    $region8: #{tpu_custom_call.1} parent=1 // loop_exit
      _
    %227 = vsyncpa [#allocation7], 1
    %s228 = scalar_lea.sflag [#allocation7], 1
    %229 = vsyncpa %s228, 1
    %230 = vsyncpa [#allocation8], 1
    %s231 = scalar_lea.sflag [#allocation8], 1
    %232 = vsyncpa %s231, 1

</llo_original>
